<compile_context>
chip_gen: v7x
topology: tpu7x:2x2x1
jax: 0.10.0
libtpu: 0.0.40
codegen_flags: <defaults>
</compile_context>

<pallas_src>
import jax
import jax.numpy as jnp
from jax.experimental import pallas as pl
from jax.experimental.pallas import tpu as pltpu


def _round_up(x, m):
    return ((x + m - 1) // m) * m


def _complex_score_kernel(p_ref, e2t_ref, out_ref):
    # p_ref   : [B, 2D]   loop-invariant batch block ([p_re | p_im], bf16)
    # e2t_ref : [2D, tn]  current entity tile ([E2_re ; E2_im].T slice, bf16)
    # out_ref : [B, tn]   sigmoid scores
    acc = jnp.dot(p_ref[...], e2t_ref[...],
                  preferred_element_type=jnp.float32)
    out_ref[...] = jax.nn.sigmoid(acc).astype(out_ref.dtype)


def prepare_entity_tables(ent_real, ent_img, dtype=jnp.bfloat16):
    """One-time prep of the static all-entity tables.

    Returns a single stacked, transposed table of shape [2D, N]
    (rows 0..D-1 = real part, rows D..2D-1 = imaginary part), cast to a
    narrow streaming dtype so the kernel streams half the bytes.
    """
    return jnp.concatenate([ent_real, ent_img], axis=1).T.astype(dtype)


def complex_forward(e1_real, e1_img, r_real, r_img, ent_t, *, tn=2048,
                    out_dtype=jnp.float32):
    """ComplEx scoring against all entities.

    e1_real/e1_img/r_real/r_img : [B, D]    batch embeddings
    ent_t                       : [2D, N]   stacked+transposed entity table
                                            (see prepare_entity_tables)
    returns S                   : [B, N]    sigmoid scores
    """
    B, D = e1_real.shape
    D2, N = ent_t.shape
    assert D2 == 2 * D, "entity table must be prepared with prepare_entity_tables"
    table_dtype = ent_t.dtype

    # Hoist the loop-invariant batch-side combination (complex product
    # identity) and pack it along the contraction axis so the kernel issues a
    # single matmul per entity tile.
    p_re = e1_real * r_real - e1_img * r_img
    p_im = e1_img * r_real + e1_real * r_img
    p = jnp.concatenate([p_re, p_im], axis=1).astype(table_dtype)   # [B, 2D]

    # Entity tiling: clamp tn to a VMEM budget (double-buffered table tile +
    # double-buffered output tile), to the 128-lane rule, and to the padded
    # entity count; then pad N to a multiple of the tile and slice it off.
    tbl_item = jnp.dtype(table_dtype).itemsize
    out_item = jnp.dtype(out_dtype).itemsize
    col_bytes = 2 * D2 * tbl_item + 2 * B * out_item      # per entity column
    vmem_budget = 24 << 20                                 # leave headroom
    tn_cap = max(128, (vmem_budget // col_bytes) // 128 * 128)
    tn = max(128, min(_round_up(tn, 128), _round_up(N, 128), tn_cap))

    n_pad = _round_up(N, tn)
    if n_pad != N:
        ent_t = jnp.pad(ent_t, ((0, 0), (0, n_pad - N)))

    grid = (n_pad // tn,)

    out = pl.pallas_call(
        _complex_score_kernel,
        out_shape=jax.ShapeDtypeStruct((B, n_pad), out_dtype),
        grid_spec=pltpu.PrefetchScalarGridSpec(
            num_scalar_prefetch=0,
            grid=grid,
            in_specs=[
                pl.BlockSpec((B, D2), lambda j: (0, 0)),    # resident batch block
                pl.BlockSpec((D2, tn), lambda j: (0, j)),   # streamed entity tile
            ],
            out_specs=pl.BlockSpec((B, tn), lambda j: (0, j)),
        ),
        compiler_params=pltpu.CompilerParams(
            dimension_semantics=("parallel",),   # shard N across TensorCores
            vmem_limit_bytes=32 << 20,
        ),
    )(p, ent_t)

    return out[:, :N] if n_pad != N else out


if __name__ == "__main__":
    key = jax.random.PRNGKey(0)
    num_entities = 256   # N
    num_relations = 16
    dim = 32             # embedding dim D
    batch = 8            # B

    k = jax.random.split(key, 6)
    # Deterministic synthetic KG embedding tables (real + imaginary parts).
    ent_real = jax.random.normal(k[0], (num_entities, dim), jnp.float32) * 0.1
    ent_img = jax.random.normal(k[1], (num_entities, dim), jnp.float32) * 0.1
    rel_real = jax.random.normal(k[2], (num_relations, dim), jnp.float32) * 0.1
    rel_img = jax.random.normal(k[3], (num_relations, dim), jnp.float32) * 0.1

    # Index inputs e1, r (the kg.get_*_embeddings lookups are plain-JAX glue).
    e1_idx = jax.random.randint(k[4], (batch,), 0, num_entities)
    r_idx = jax.random.randint(k[5], (batch,), 0, num_relations)

    E1_real = ent_real[e1_idx]   # [B, D]
    E1_img = ent_img[e1_idx]     # [B, D]
    R_real = rel_real[r_idx]     # [B, D]
    R_img = rel_img[r_idx]       # [B, D]

    # One-time table prep (static model parameters): stack + transpose + bf16.
    ent_t = prepare_entity_tables(ent_real, ent_img)

    S = complex_forward(E1_real, E1_img, R_real, R_img, ent_t)
    S = jax.block_until_ready(S)
    assert S.shape == (batch, num_entities)

    # --- Reference 1: exact PyTorch semantics in full f32 (loose tol for the
    # bf16 table quantization). ---
    def dist_mult(A, B_, C):
        return (A * B_) @ C.T
    ref_full = jax.nn.sigmoid(
        dist_mult(R_real, E1_real, ent_real)
        + dist_mult(R_real, E1_img, ent_img)
        + dist_mult(R_img, E1_real, ent_img)
        - dist_mult(R_img, E1_img, ent_real))
    assert jnp.allclose(S, ref_full, atol=5e-3), "loose f32 reference mismatch"

    # --- Reference 2: same bf16-quantized operands the kernel consumed,
    # accumulated in f32 (tight tolerance). ---
    p_re_q = E1_real * R_real - E1_img * R_img
    p_im_q = E1_img * R_real + E1_real * R_img
    p_q = jnp.concatenate([p_re_q, p_im_q], axis=1
                          ).astype(jnp.bfloat16).astype(jnp.float32)
    e_q = jnp.concatenate([ent_real, ent_img], axis=1
                          ).astype(jnp.bfloat16).astype(jnp.float32)
    ref_q = jax.nn.sigmoid(p_q @ e_q.T)
    assert jnp.allclose(S, ref_q, atol=1e-5, rtol=1e-5), "tight bf16 reference mismatch"

    print("KERNEL_OK")
</pallas_src>

<mosaic_0001>
module attributes {stable_mosaic.version = 11 : i64} {
  func.func @_complex_score_kernel(%arg0: i32, %arg1: memref<8x64xbf16, #tpu.memory_space<vmem>>, %arg2: memref<64x256xbf16, #tpu.memory_space<vmem>>, %arg3: memref<8x256xf32, #tpu.memory_space<vmem>>) attributes {dimension_semantics = [#tpu.dimension_semantics<parallel>], iteration_bounds = array<i64: 1>, scalar_prefetch = 0 : i64, scratch_operands = 0 : i64, tpu.core_type = #tpu.core_type<tc>, window_params = [{pipeline_mode = #tpu.pipeline_mode<synchronous>, transform_indices = @transform_0, window_bounds = array<i64: 8, 64>}, {transform_indices = @transform_1, window_bounds = array<i64: 64, 256>}, {transform_indices = @transform_2, window_bounds = array<i64: 8, 256>}]} {
    %c0 = arith.constant 0 : index
    %c0_0 = arith.constant 0 : index
    %0 = vector.load %arg1[%c0, %c0_0] : memref<8x64xbf16, #tpu.memory_space<vmem>>, vector<8x64xbf16>
    %c0_1 = arith.constant 0 : index
    %c0_2 = arith.constant 0 : index
    %1 = vector.load %arg2[%c0_1, %c0_2] : memref<64x256xbf16, #tpu.memory_space<vmem>>, vector<64x256xbf16>
    %cst = arith.constant dense<0.000000e+00> : vector<8x256xf32>
    %2 = tpu.matmul %0, %1, %cst {dimension_numbers = #tpu.dot_dimension_numbers<[1], [0], [0], [1], [0, 0, 1, 1], [], []>} : vector<8x64xbf16>, vector<64x256xbf16>, vector<8x256xf32> -> vector<8x256xf32>
    %3 = arith.negf %2 : vector<8x256xf32>
    %4 = math.exp %3 : vector<8x256xf32>
    %cst_3 = arith.constant 1.000000e+00 : f32
    %5 = vector.broadcast %cst_3 : f32 to vector<8x256xf32>
    %6 = arith.addf %5, %4 : vector<8x256xf32>
    %7 = arith.divf %5, %6 : vector<8x256xf32>
    %c0_4 = arith.constant 0 : index
    %c0_5 = arith.constant 0 : index
    %8 = vector.load %arg3[%c0_4, %c0_5] : memref<8x256xf32, #tpu.memory_space<vmem>>, vector<8x256xf32>
    tpu.vector_store %arg3[%c0_4, %c0_5], %7 {strides = array<i32>} : memref<8x256xf32, #tpu.memory_space<vmem>>, vector<8x256xf32>,
    return
  }
  func.func @transform_0(%arg0: i32) -> (i32, i32) {
    %c0_i32 = arith.constant 0 : i32
    %c0_i32_0 = arith.constant 0 : i32
    %c0_i32_1 = arith.constant 0 : i32
    return %c0_i32, %c0_i32_0 : i32, i32
  }
  func.func @transform_1(%arg0: i32) -> (i32, i32) {
    %c0_i32 = arith.constant 0 : i32
    %c0_i32_0 = arith.constant 0 : i32
    return %c0_i32, %arg0 : i32, i32
  }
  func.func @transform_2(%arg0: i32) -> (i32, i32) {
    %c0_i32 = arith.constant 0 : i32
    %c0_i32_0 = arith.constant 0 : i32
    return %c0_i32, %arg0 : i32, i32
  }
}

</mosaic_0001>

<llo_original>
// kernel: tpu_custom_call.1
$region0: #{tpu_custom_call.1}
  #allocation0 [shape = 'u32[]', space=smem, size = 0x4, offset = 0x4, fixed_abs, tag = 'smem constant byte address 0x4 - core index']
  #allocation1 [shape = 'u32[144,128]{1,0:T(1,128)}', space=vmem, size = 0x12000, scoped, tag = 'internal scratch']
  %s0 = inlined_call_operand.hbm [shape: bf16[8,64], index: 0, kind: input, shape index: {}]
  %s1 = inlined_call_operand.hbm [shape: bf16[64,256], index: 1, kind: input, shape index: {}]
  %s2 = inlined_call_operand.hbm [shape: f32[8,256], index: 2, kind: output, shape index: {}]
  %s3 = sld [smem:[#allocation0]]
  $region26: #{tpu_custom_call.1} parent=0
    _
  %s5 = ssub.s32 1, %s3
  %s6 = scalar_select 0, %s5, %s3
  $region1: #{tpu_custom_call.1} parent=0
    #allocation2 [shape = 'u8[2048]{0}', space=vmem, size = 0x800, scoped, tag = 'input window, operand 0, single buffered']
    #allocation3 [shape = 's32[1]{0}', space=sflag, size = 0x4, scoped, tag = 'scoped memory for tpu_custom_call.1']
    #allocation4 [shape = 's32[1]{0}', space=sflag, size = 0x4, scoped, tag = 'scoped memory for tpu_custom_call.1']
    #allocation5 [shape = 'u8[32768]{0}', space=vmem, size = 0x8000, scoped, tag = 'input window, operand 1, single buffered']
    #allocation6 [shape = 's32[1]{0}', space=sflag, size = 0x4, scoped, tag = 'scoped memory for tpu_custom_call.1']
    #allocation7 [shape = 'u8[8192]{0}', space=vmem, size = 0x2000, scoped, tag = 'output window, operand 0, single buffered']
    %7 = vsyncpa [#allocation3], 0
    %8 = vsyncpa [#allocation6], 0
    %9 = vsyncpa [#allocation4], 0
    // Predicated region
    $region2: #{tpu_custom_call.1} parent=1 // pred_check
      _
    $region3: #{tpu_custom_call.1} parent=1 // pred_check_branch
      %11 = sbr.rel (0) target = $region5
    $region4: #{tpu_custom_call.1} parent=1 // pred_region
      %s13 = ssub.s32 64, 64
      %14 = vsyncadd [#allocation3], %s13
      %s16 = sshll.u32 [#allocation2], 4
      %s17 = int_to_ptr.vmem [resolvable:$true] %s16
      %19 = dma.hbm_to_vmem [thread:$0]  %s0, 64, %s17, [#allocation3]
    $region5: #{tpu_custom_call.1} parent=1 // pred_fallthru
      _
    // Predicated region
    $region6: #{tpu_custom_call.1} parent=1 // pred_check
      _
    $region7: #{tpu_custom_call.1} parent=1 // pred_check_branch
      %21 = sbr.rel (0) target = $region9
    $region8: #{tpu_custom_call.1} parent=1 // pred_region
      %s23 = ssub.s32 1024, 1024
      %24 = vsyncadd [#allocation6], %s23
      %s25 = sshll.u32 [#allocation5], 4
      %s26 = int_to_ptr.vmem [resolvable:$true] %s25
      %31 = dma.hbm_to_vmem [thread:$0]  %s1, 1024, %s26, [#allocation6], 128, 128, 8
    $region9: #{tpu_custom_call.1} parent=1 // pred_fallthru
      _
    // Predicated region
    $region10: #{tpu_custom_call.1} parent=1 // pred_check
      _
    $region11: #{tpu_custom_call.1} parent=1 // pred_check_branch
      %33 = sbr.rel (0) target = $region13
    $region12: #{tpu_custom_call.1} parent=1 // pred_region
      %34 = dma.done [#allocation3], 64
    $region13: #{tpu_custom_call.1} parent=1 // pred_fallthru
      _
    // Predicated region
    $region14: #{tpu_custom_call.1} parent=1 // pred_check
      _
    $region15: #{tpu_custom_call.1} parent=1 // pred_check_branch
      %36 = sbr.rel (0) target = $region17
    $region16: #{tpu_custom_call.1} parent=1 // pred_region
      %37 = dma.done [#allocation6], 1024
    $region17: #{tpu_custom_call.1} parent=1 // pred_fallthru
      _
    %v39 = vld [vmem:[#allocation2] sm:$0xf]
    %v40 = vld [vmem:[#allocation5] sm:$0xff]
    %v41 = vld [vmem:[#allocation5 + $0x8] sm:$0xff]
    %v42 = vld [vmem:[#allocation5 + $0x10] sm:$0xff]
    %v43 = vld [vmem:[#allocation5 + $0x18] sm:$0xff]
    %v44 = vld [vmem:[#allocation5 + $0x20] sm:$0xff]
    %v45 = vld [vmem:[#allocation5 + $0x28] sm:$0xff]
    %v46 = vld [vmem:[#allocation5 + $0x30] sm:$0xff]
    %v47 = vld [vmem:[#allocation5 + $0x38] sm:$0xff]
    %v56 = vunpack.c.l.b16 %v40
    %v57 = vunpack.c.h.b16 %v40
    %v58 = vunpack.c.l.b16 %v41
    %v59 = vunpack.c.h.b16 %v41
    %v60 = vunpack.c.l.b16 %v42
    %v61 = vunpack.c.h.b16 %v42
    %v62 = vunpack.c.l.b16 %v43
    %v63 = vunpack.c.h.b16 %v43
    %v64 = vunpack.c.l.b16 %v44
    %v65 = vunpack.c.h.b16 %v44
    %v66 = vunpack.c.l.b16 %v45
    %v67 = vunpack.c.h.b16 %v45
    %v68 = vunpack.c.l.b16 %v46
    %v69 = vunpack.c.h.b16 %v46
    %v70 = vunpack.c.l.b16 %v47
    %v71 = vunpack.c.h.b16 %v47
    %v72 = vpack.c.b16 %v58, %v56
    %v73 = vpack.c.b16 %v59, %v57
    %v74 = vpack.c.b16 %v62, %v60
    %v75 = vpack.c.b16 %v63, %v61
    %v76 = vpack.c.b16 %v66, %v64
    %v77 = vpack.c.b16 %v67, %v65
    %v78 = vpack.c.b16 %v70, %v68
    %v79 = vpack.c.b16 %v71, %v69
    %vm88 = vcmask 523264
    %v90 = vsel %vm88, %v39, 0
    %92 = vmatprep.subr.bf16.mxu0 %v73
    %93 = vmatpush1.bf16.msra.mxu0 %v72
    %94 = vmatprep.subr.bf16.mxu0 %v75
    %95 = vmatpush1.bf16.msra.mxu0 %v74
    %96 = vmatprep.subr.bf16.mxu0 %v77
    %97 = vmatpush1.bf16.msra.mxu0 %v76
    %98 = vmatprep.subr.bf16.mxu0 %v79
    %99 = vmatpush1.bf16.msra.mxu0 %v78
    %100 = vmatprep.subr.bf16.mxu0 0
    %101 = vmatpush1.bf16.msra.mxu0 0
    %102 = vmatprep.subr.bf16.mxu0 0
    %103 = vmatpush1.bf16.msra.mxu0 0
    %104 = vmatprep.subr.bf16.mxu0 0
    %105 = vmatpush1.bf16.msra.mxu0 0
    %106 = vmatprep.subr.bf16.mxu0 0
    %107 = vmatpush1.bf16.msra.mxu0 0
    %108 = vmatprep.subr.bf16.mxu0 0
    %109 = vmatpush1.bf16.msra.mxu0 0
    %110 = vmatprep.subr.bf16.mxu0 0
    %111 = vmatpush1.bf16.msra.mxu0 0
    %112 = vmatprep.subr.bf16.mxu0 0
    %113 = vmatpush1.bf16.msra.mxu0 0
    %114 = vmatprep.subr.bf16.mxu0 0
    %115 = vmatpush1.bf16.msra.mxu0 0
    %116 = vmatprep.subr.bf16.mxu0 0
    %117 = vmatpush1.bf16.msra.mxu0 0
    %118 = vmatprep.subr.bf16.mxu0 0
    %119 = vmatpush1.bf16.msra.mxu0 0
    %120 = vmatprep.subr.bf16.mxu0 0
    %121 = vmatpush1.bf16.msra.mxu0 0
    %122 = vmatprep.subr.bf16.mxu0 0
    %123 = vmatpush1.bf16.msra.mxu0 0
    %124 = vmatprep.mubr.bf16.mxu0 0
    %125 = vmatmul.mubr.bf16.gmra.mrb[0].mxu0 %v90
    %v126 = vpop.f32.mrb[0].mxu0
    %v127 = vadd.f32 0.0, %v126
    %v128 = vpop.f32.mrb[0].mxu0
    %v129 = vadd.f32 0.0, %v128
    %v130 = vpop.f32.mrb[0].mxu0
    %v131 = vpop.f32.mrb[0].mxu0
    %132 = vdwg.mxu0
    %v133 = vxor.u32 %v127, 2147483648
    %v134 = vxor.u32 %v129, 2147483648
    %v135 = vmul.f32 %v133, 1.442695
    %v136 = vpow.pop %v135
    %v137 = vmul.f32 %v134, 1.442695
    %v138 = vpow.pop %v137
    %v139 = vadd.f32 %v136, 1.0
    %v140 = vadd.f32 %v138, 1.0
    %v141 = vrcp.pop %v139
    %v142 = vmul.f32 1.0, %v141
    %v143 = vrcp.pop %v140
    %v144 = vmul.f32 1.0, %v143
    %145 = vst [vmem:[#allocation7] sm:$0xff] %v142
    %146 = vst [vmem:[#allocation7 + $0x8] sm:$0xff] %v144
    // Predicated region
    $region18: #{tpu_custom_call.1} parent=1 // pred_check
      _
    $region19: #{tpu_custom_call.1} parent=1 // pred_check_branch
      %148 = sbr.rel (0) target = $region21
    $region20: #{tpu_custom_call.1} parent=1 // pred_region
      %s150 = ssub.s32 256, 256
      %151 = vsyncadd [#allocation4], %s150
      %s153 = sshll.u32 [#allocation7], 4
      %s154 = int_to_ptr.vmem [resolvable:$true] %s153
      %156 = dma.vmem_to_hbm [thread:$0]  %s154, 256, %s2, [#allocation4]
    $region21: #{tpu_custom_call.1} parent=1 // pred_fallthru
      _
    // Predicated region
    $region22: #{tpu_custom_call.1} parent=1 // pred_check
      _
    $region23: #{tpu_custom_call.1} parent=1 // pred_check_branch
      %158 = sbr.rel (0) target = $region25
    $region24: #{tpu_custom_call.1} parent=1 // pred_region
      %159 = dma.done [#allocation4], 256
    $region25: #{tpu_custom_call.1} parent=1 // pred_fallthru
      _
    %160 = vsyncpa [#allocation3], 1
    %161 = vsyncpa [#allocation6], 1
    %162 = vsyncpa [#allocation4], 1

</llo_original>
